<compile_context>
chip_gen: v7x
topology: tpu7x:2x2x1
jax: 0.10.0
libtpu: 0.0.40
codegen_flags: <defaults>
</compile_context>

<pallas_src>
import jax
import jax.numpy as jnp
import numpy as np
from jax.experimental import pallas as pl
from jax.experimental.pallas import tpu as pltpu

# Canonical order of the 10 learnable log-variance params (as in the module).
PARAM_ORDER = ("sax", "sax_2", "sax_3", "saq", "sa_l2",
               "sa_classification", "sa_regression", "sa_mask",
               "sa_decode_layout", "sa_decode_semantics")


def multi_loss_kernel(p_ref, aux_ref, pt_ref, tt_ref, pr_ref, tr_ref, out_ref):
    """p_ref:   (2, 5) f32 -- row0 = [sax, sax_2, sax_3, saq, sa_l2]
                              row1 = [sa_cls, sa_reg, sa_mask, sa_dec_lay, sa_dec_sem]
       aux_ref: (1, 5) f32 -- [cls_loss, reg_loss, mask_loss, dec_layout, dec_sem]
       pt/tt:   (1, n_t) f32 pred / target translations (lane-dense, flattened)
       pr/tr:   (1, n_q) f32 pred / target rotations
       out_ref: (1, 128) f32 -- lanes [loss, t_loss, q_loss, t_loss_2, t_loss_3, 0...]"""
    # ---- hot path: two L1 means (one VPU abs/sub pass + one lane reduce each) ----
    n_t = pt_ref.shape[-1]
    n_q = pr_ref.shape[-1]
    t_loss_2 = jnp.sum(jnp.abs(pt_ref[...] - tt_ref[...])) * (1.0 / n_t)
    q_loss = jnp.sum(jnp.abs(pr_ref[...] - tr_ref[...])) * (1.0 / n_q)

    # ---- uncertainty-weighted combination over the 10 params (two 5-lane rows) ----
    p = p_ref[...]                                 # (2, 5)
    exp_neg = jnp.exp(-p)                          # (2, 5)  EUP, basically free
    aux = aux_ref[...]                             # (1, 5)
    lane = jax.lax.broadcasted_iota(jnp.int32, (1, 5), 1)

    # pose/l2 row: losses = [t_loss=0, t_loss_2, t_loss_3=0, q_loss, l2=0]
    zeros5 = jnp.zeros((1, 5), jnp.float32)
    pose_losses = jnp.where(lane == 1, t_loss_2, zeros5)
    pose_losses = jnp.where(lane == 3, q_loss, pose_losses)
    total_pose = jnp.sum(exp_neg[0:1, :] * pose_losses + p[0:1, :])

    # aux row: cls/reg/mask always active; decode slots gated on (loss != 0),
    # matching the reference's `if loss_decode_* != 0` forward semantics.
    gate = jnp.where(lane < 3, jnp.float32(1.0),
                     (aux != 0.0).astype(jnp.float32))
    total_aux = jnp.sum(gate * (exp_neg[1:2, :] * aux + p[1:2, :]))

    total = total_pose + total_aux

    # ---- single lane-dense (1, 128) output: one unmasked vector store ----
    oidx = jax.lax.broadcasted_iota(jnp.int32, (1, 128), 1)
    out = jnp.zeros((1, 128), jnp.float32)
    out = jnp.where(oidx == 0, total, out)          # loss
    out = jnp.where(oidx == 2, q_loss, out)         # q_loss
    out = jnp.where(oidx == 3, t_loss_2, out)       # t_loss_2
    # lanes 1 (t_loss) and 4 (t_loss_3) stay 0, as in the reference module
    out_ref[...] = out


def multi_loss_forward(params10, pred_abs_T, target_abs_T, pred_R, targ_R,
                       classification_loss, regression_loss, mask_bce_loss,
                       loss_decode_layout=0.0, loss_decode_semantics=0.0):
    """params10: pre-stacked (10,) f32 array in PARAM_ORDER (from the train state)."""
    # single reshape: row 0 = pose/l2 params, row 1 = aux params
    p = jnp.asarray(params10, jnp.float32).reshape(2, 5)

    # lane-dense flatten only (free); NO wrapper-side concat / zero-pad
    pt = jnp.asarray(pred_abs_T, jnp.float32).reshape(1, -1)
    tt = jnp.asarray(target_abs_T, jnp.float32).reshape(1, -1)
    pr = jnp.asarray(pred_R, jnp.float32).reshape(1, -1)
    tr = jnp.asarray(targ_R, jnp.float32).reshape(1, -1)

    # single 5-element stack for the aux scalar losses
    aux = jnp.stack([jnp.asarray(classification_loss, jnp.float32),
                     jnp.asarray(regression_loss, jnp.float32),
                     jnp.asarray(mask_bce_loss, jnp.float32),
                     jnp.asarray(loss_decode_layout, jnp.float32),
                     jnp.asarray(loss_decode_semantics, jnp.float32)]).reshape(1, 5)

    n_t, n_q = pt.shape[1], pr.shape[1]
    vmem = pl.BlockSpec(memory_space=pltpu.MemorySpace.VMEM)
    out = pl.pallas_call(
        multi_loss_kernel,
        out_shape=jax.ShapeDtypeStruct((1, 128), jnp.float32),
        # Tiny tensors -> full-array VMEM-resident blocks, no grid needed.
        in_specs=[vmem] * 6,
        out_specs=vmem,
        cost_estimate=pl.CostEstimate(
            flops=int(3 * (n_t + n_q) + 64),
            transcendentals=10,
            bytes_accessed=int(4 * (2 * n_t + 2 * n_q + 15 + 128))),
    )(p, aux, pt, tt, pr, tr)

    # unpack: (loss, t_loss, q_loss, t_loss_2, t_loss_3)
    return out[0, 0], out[0, 1], out[0, 2], out[0, 3], out[0, 4]


def reference_forward(params10, pred_abs_T, target_abs_T, pred_R, targ_R,
                      cls_loss, reg_loss, mask_loss, dl, ds):
    # Pure numpy mirror of the PyTorch module (python control flow for decode gates).
    pmap = {k: float(params10[i]) for i, k in enumerate(PARAM_ORDER)}
    t_loss, t_loss_3 = 0.0, 0.0
    t_loss_2 = float(np.mean(np.abs(pred_abs_T - target_abs_T)))
    q_loss = float(np.mean(np.abs(pred_R - targ_R)))
    loss = (np.exp(-pmap["sax"]) * t_loss + pmap["sax"]
            + np.exp(-pmap["sax_2"]) * t_loss_2 + pmap["sax_2"]
            + np.exp(-pmap["sax_3"]) * t_loss_3 + pmap["sax_3"]
            + np.exp(-pmap["saq"]) * q_loss + pmap["saq"])
    loss += (np.exp(-pmap["sa_l2"]) * 0.0 + pmap["sa_l2"]
             + np.exp(-pmap["sa_classification"]) * cls_loss + pmap["sa_classification"]
             + np.exp(-pmap["sa_regression"]) * reg_loss + pmap["sa_regression"]
             + np.exp(-pmap["sa_mask"]) * mask_loss + pmap["sa_mask"])
    if dl != 0.0:
        loss += np.exp(-pmap["sa_decode_layout"]) * dl + pmap["sa_decode_layout"]
    if ds != 0.0:
        loss += np.exp(-pmap["sa_decode_semantics"]) * ds + pmap["sa_decode_semantics"]
    return loss, t_loss, q_loss, t_loss_2, t_loss_3


if __name__ == "__main__":
    key = jax.random.PRNGKey(0)
    kp, k1, k2, k3, k4 = jax.random.split(key, 5)
    B, N = 2, 8

    # learnable log-variance params, pre-stacked (non-zero to exercise exp weighting)
    params10 = 0.1 * jax.random.normal(kp, (10,), jnp.float32)

    pred_T = jax.random.normal(k1, (B, N, 3), jnp.float32)   # abs translation
    targ_T = jax.random.normal(k2, (B, N, 3), jnp.float32)
    pred_R = jax.random.normal(k3, (B, N, 4), jnp.float32)   # rotation (quaternion)
    targ_R = jax.random.normal(k4, (B, N, 4), jnp.float32)

    cls_loss, reg_loss, mask_loss = 0.7, 0.3, 0.2
    dl, ds = 0.5, 0.0   # decode-layout active; decode-semantics gated off

    out = multi_loss_forward(params10, pred_T, targ_T, pred_R, targ_R,
                             cls_loss, reg_loss, mask_loss, dl, ds)
    out = jax.block_until_ready(out)

    ref = reference_forward(np.asarray(params10),
                            np.asarray(pred_T), np.asarray(targ_T),
                            np.asarray(pred_R), np.asarray(targ_R),
                            cls_loss, reg_loss, mask_loss, dl, ds)

    got = np.array([float(v) for v in out])
    want = np.array([float(v) for v in ref])
    assert np.allclose(got, want, rtol=1e-5, atol=1e-5), (got, want)

    print("KERNEL_OK")
</pallas_src>

<mosaic_0001>
module attributes {stable_mosaic.version = 11 : i64} {
  func.func @multi_loss_kernel(%arg0: memref<2x5xf32, #tpu.memory_space<vmem>>, %arg1: memref<1x5xf32, #tpu.memory_space<vmem>>, %arg2: memref<1x48xf32, #tpu.memory_space<vmem>>, %arg3: memref<1x48xf32, #tpu.memory_space<vmem>>, %arg4: memref<1x64xf32, #tpu.memory_space<vmem>>, %arg5: memref<1x64xf32, #tpu.memory_space<vmem>>, %arg6: memref<1x128xf32, #tpu.memory_space<vmem>>) attributes {dimension_semantics = [], scalar_prefetch = 0 : i64, scratch_operands = 0 : i64, tpu.core_type = #tpu.core_type<tc>} {
    %c0 = arith.constant 0 : index
    %c0_0 = arith.constant 0 : index
    %0 = vector.load %arg2[%c0, %c0_0] : memref<1x48xf32, #tpu.memory_space<vmem>>, vector<1x48xf32>
    %c0_1 = arith.constant 0 : index
    %c0_2 = arith.constant 0 : index
    %1 = vector.load %arg3[%c0_1, %c0_2] : memref<1x48xf32, #tpu.memory_space<vmem>>, vector<1x48xf32>
    %2 = arith.subf %0, %1 : vector<1x48xf32>
    %3 = math.absf %2 : vector<1x48xf32>
    %4 = vector.shape_cast %3 : vector<1x48xf32> to vector<1x1x48xf32>
    %cst = arith.constant dense<0.000000e+00> : vector<1xf32>
    %5 = vector.multi_reduction <add>, %4, %cst [1, 2] : vector<1x1x48xf32> to vector<1xf32>
    %6 = vector.shape_cast %5 : vector<1xf32> to vector<1x1x1xf32>
    %7 = vector.extract %6[0, 0, 0] : f32 from vector<1x1x1xf32>
    %cst_3 = arith.constant 0.020833334 : f32
    %8 = arith.mulf %7, %cst_3 : f32
    %c0_4 = arith.constant 0 : index
    %c0_5 = arith.constant 0 : index
    %9 = vector.load %arg4[%c0_4, %c0_5] : memref<1x64xf32, #tpu.memory_space<vmem>>, vector<1x64xf32>
    %c0_6 = arith.constant 0 : index
    %c0_7 = arith.constant 0 : index
    %10 = vector.load %arg5[%c0_6, %c0_7] : memref<1x64xf32, #tpu.memory_space<vmem>>, vector<1x64xf32>
    %11 = arith.subf %9, %10 : vector<1x64xf32>
    %12 = math.absf %11 : vector<1x64xf32>
    %13 = vector.shape_cast %12 : vector<1x64xf32> to vector<1x1x64xf32>
    %cst_8 = arith.constant dense<0.000000e+00> : vector<1xf32>
    %14 = vector.multi_reduction <add>, %13, %cst_8 [1, 2] : vector<1x1x64xf32> to vector<1xf32>
    %15 = vector.shape_cast %14 : vector<1xf32> to vector<1x1x1xf32>
    %16 = vector.extract %15[0, 0, 0] : f32 from vector<1x1x1xf32>
    %cst_9 = arith.constant 1.562500e-02 : f32
    %17 = arith.mulf %16, %cst_9 : f32
    %c0_10 = arith.constant 0 : index
    %c0_11 = arith.constant 0 : index
    %18 = vector.load %arg0[%c0_10, %c0_11] : memref<2x5xf32, #tpu.memory_space<vmem>>, vector<2x5xf32>
    %cst_12 = arith.constant 0.000000e+00 : f32
    %19 = vector.broadcast %cst_12 : f32 to vector<2x5xf32>
    %20 = arith.subf %19, %18 : vector<2x5xf32>
    %21 = math.exp %20 : vector<2x5xf32>
    %c0_13 = arith.constant 0 : index
    %c0_14 = arith.constant 0 : index
    %22 = vector.load %arg1[%c0_13, %c0_14] : memref<1x5xf32, #tpu.memory_space<vmem>>, vector<1x5xf32>
    %23 = tpu.iota {dimensions = array<i32: 1>} : vector<1x5xi32>
    %cst_15 = arith.constant 0.000000e+00 : f32
    %24 = vector.broadcast %cst_15 : f32 to vector<1x5xf32>
    %c1_i32 = arith.constant 1 : i32
    %25 = vector.broadcast %c1_i32 : i32 to vector<1x5xi32>
    %26 = arith.cmpi eq, %23, %25 : vector<1x5xi32>
    %27 = vector.broadcast %8 : f32 to vector<1x5xf32>
    %28 = arith.select %26, %27, %24 : vector<1x5xi1>, vector<1x5xf32>
    %c3_i32 = arith.constant 3 : i32
    %29 = vector.broadcast %c3_i32 : i32 to vector<1x5xi32>
    %30 = arith.cmpi eq, %23, %29 : vector<1x5xi32>
    %31 = vector.broadcast %17 : f32 to vector<1x5xf32>
    %32 = arith.select %30, %31, %28 : vector<1x5xi1>, vector<1x5xf32>
    %33 = vector.extract_strided_slice %21 {offsets = [0, 0], sizes = [1, 5], strides = [1, 1]} : vector<2x5xf32> to vector<1x5xf32>
    %34 = arith.mulf %33, %32 : vector<1x5xf32>
    %35 = vector.extract_strided_slice %18 {offsets = [0, 0], sizes = [1, 5], strides = [1, 1]} : vector<2x5xf32> to vector<1x5xf32>
    %36 = arith.addf %34, %35 : vector<1x5xf32>
    %37 = vector.shape_cast %36 : vector<1x5xf32> to vector<1x1x5xf32>
    %cst_16 = arith.constant dense<0.000000e+00> : vector<1xf32>
    %38 = vector.multi_reduction <add>, %37, %cst_16 [1, 2] : vector<1x1x5xf32> to vector<1xf32>
    %39 = vector.shape_cast %38 : vector<1xf32> to vector<1x1x1xf32>
    %40 = vector.extract %39[0, 0, 0] : f32 from vector<1x1x1xf32>
    %c3_i32_17 = arith.constant 3 : i32
    %41 = vector.broadcast %c3_i32_17 : i32 to vector<1x5xi32>
    %42 = arith.cmpi slt, %23, %41 : vector<1x5xi32>
    %cst_18 = arith.constant 0.000000e+00 : f32
    %43 = vector.broadcast %cst_18 : f32 to vector<1x5xf32>
    %44 = arith.cmpf one, %22, %43 : vector<1x5xf32>
    %45 = arith.extui %44 : vector<1x5xi1> to vector<1x5xi32>
    %46 = arith.sitofp %45 : vector<1x5xi32> to vector<1x5xf32>
    %cst_19 = arith.constant 1.000000e+00 : f32
    %47 = vector.broadcast %cst_19 : f32 to vector<1x5xf32>
    %48 = arith.select %42, %47, %46 : vector<1x5xi1>, vector<1x5xf32>
    %49 = vector.extract_strided_slice %21 {offsets = [1, 0], sizes = [1, 5], strides = [1, 1]} : vector<2x5xf32> to vector<1x5xf32>
    %50 = arith.mulf %49, %22 : vector<1x5xf32>
    %51 = vector.extract_strided_slice %18 {offsets = [1, 0], sizes = [1, 5], strides = [1, 1]} : vector<2x5xf32> to vector<1x5xf32>
    %52 = arith.addf %50, %51 : vector<1x5xf32>
    %53 = arith.mulf %48, %52 : vector<1x5xf32>
    %54 = vector.shape_cast %53 : vector<1x5xf32> to vector<1x1x5xf32>
    %cst_20 = arith.constant dense<0.000000e+00> : vector<1xf32>
    %55 = vector.multi_reduction <add>, %54, %cst_20 [1, 2] : vector<1x1x5xf32> to vector<1xf32>
    %56 = vector.shape_cast %55 : vector<1xf32> to vector<1x1x1xf32>
    %57 = vector.extract %56[0, 0, 0] : f32 from vector<1x1x1xf32>
    %58 = arith.addf %40, %57 : f32
    %59 = tpu.iota {dimensions = array<i32: 1>} : vector<1x128xi32>
    %cst_21 = arith.constant 0.000000e+00 : f32
    %60 = vector.broadcast %cst_21 : f32 to vector<1x128xf32>
    %c0_i32 = arith.constant 0 : i32
    %61 = vector.broadcast %c0_i32 : i32 to vector<1x128xi32>
    %62 = arith.cmpi eq, %59, %61 : vector<1x128xi32>
    %63 = vector.broadcast %58 : f32 to vector<1x128xf32>
    %64 = arith.select %62, %63, %60 : vector<1x128xi1>, vector<1x128xf32>
    %c2_i32 = arith.constant 2 : i32
    %65 = vector.broadcast %c2_i32 : i32 to vector<1x128xi32>
    %66 = arith.cmpi eq, %59, %65 : vector<1x128xi32>
    %67 = vector.broadcast %17 : f32 to vector<1x128xf32>
    %68 = arith.select %66, %67, %64 : vector<1x128xi1>, vector<1x128xf32>
    %c3_i32_22 = arith.constant 3 : i32
    %69 = vector.broadcast %c3_i32_22 : i32 to vector<1x128xi32>
    %70 = arith.cmpi eq, %59, %69 : vector<1x128xi32>
    %71 = vector.broadcast %8 : f32 to vector<1x128xf32>
    %72 = arith.select %70, %71, %68 : vector<1x128xi1>, vector<1x128xf32>
    %c0_23 = arith.constant 0 : index
    %c0_24 = arith.constant 0 : index
    %73 = vector.load %arg6[%c0_23, %c0_24] : memref<1x128xf32, #tpu.memory_space<vmem>>, vector<1x128xf32>
    tpu.vector_store %arg6[%c0_23, %c0_24], %72 {strides = array<i32>} : memref<1x128xf32, #tpu.memory_space<vmem>>, vector<1x128xf32>,
    return
  }
}

</mosaic_0001>

<llo_original>
// kernel: tpu_custom_call.1
$region0: #{tpu_custom_call.1}
  #allocation0 [shape = 'u32[]', space=smem, size = 0x4, offset = 0x4, fixed_abs, tag = 'smem constant byte address 0x4 - core index']
  #allocation1 [shape = 'u32[144,128]{1,0:T(1,128)}', space=vmem, size = 0x12000, scoped, tag = 'internal scratch']
  %s0 = inlined_call_operand.hbm [shape: f32[2,5], index: 0, kind: input, shape index: {}]
  %s1 = inlined_call_operand.vmem [shape: f32[1,5], index: 1, kind: input, shape index: {}]
  %s2 = inlined_call_operand.vmem [shape: f32[1,48], index: 2, kind: input, shape index: {}]
  %s3 = inlined_call_operand.vmem [shape: f32[1,48], index: 3, kind: input, shape index: {}]
  %s4 = inlined_call_operand.vmem [shape: f32[1,64], index: 4, kind: input, shape index: {}]
  %s5 = inlined_call_operand.vmem [shape: f32[1,64], index: 5, kind: input, shape index: {}]
  %s6 = inlined_call_operand.hbm [shape: f32[1,128], index: 6, kind: output, shape index: {}]
  %s7 = sld [smem:[#allocation0]]
  $region38: #{tpu_custom_call.1} parent=0
    _
  %s9 = ssub.s32 1, %s7
  %s10 = scalar_select 0, %s9, %s7
  $region1: #{tpu_custom_call.1} parent=0
    #allocation2 [shape = 'u8[1024]{0}', space=vmem, size = 0x400, scoped, tag = 'input window, operand 0, single buffered']
    #allocation3 [shape = 's32[1]{0}', space=sflag, size = 0x4, scoped, tag = 'scoped memory for tpu_custom_call.1']
    #allocation4 [shape = 's32[1]{0}', space=sflag, size = 0x4, scoped, tag = 'scoped memory for tpu_custom_call.1']
    #allocation5 [shape = 'u8[512]{0}', space=vmem, size = 0x400, scoped, tag = 'output window, operand 0, single buffered']
    %11 = vsyncpa [#allocation3], 0
    %12 = vsyncpa [#allocation4], 0
    // Predicated region
    $region2: #{tpu_custom_call.1} parent=1 // pred_check
      _
    $region3: #{tpu_custom_call.1} parent=1 // pred_check_branch
      %14 = sbr.rel (0) target = $region5
    $region4: #{tpu_custom_call.1} parent=1 // pred_region
      %s16 = ssub.s32 32, 32
      %17 = vsyncadd [#allocation3], %s16
      %s19 = sshll.u32 [#allocation2], 4
      %s20 = int_to_ptr.vmem [resolvable:$true] %s19
      %22 = dma.hbm_to_vmem [thread:$0]  %s0, 32, %s20, [#allocation3]
    $region5: #{tpu_custom_call.1} parent=1 // pred_fallthru
      _
    // Predicated region
    $region6: #{tpu_custom_call.1} parent=1 // pred_check
      _
    $region7: #{tpu_custom_call.1} parent=1 // pred_check_branch
      %24 = sbr.rel (0) target = $region9
    $region8: #{tpu_custom_call.1} parent=1 // pred_region
      _
    $region9: #{tpu_custom_call.1} parent=1 // pred_fallthru
      _
    // Predicated region
    $region10: #{tpu_custom_call.1} parent=1 // pred_check
      _
    $region11: #{tpu_custom_call.1} parent=1 // pred_check_branch
      %26 = sbr.rel (0) target = $region13
    $region12: #{tpu_custom_call.1} parent=1 // pred_region
      _
    $region13: #{tpu_custom_call.1} parent=1 // pred_fallthru
      _
    // Predicated region
    $region14: #{tpu_custom_call.1} parent=1 // pred_check
      _
    $region15: #{tpu_custom_call.1} parent=1 // pred_check_branch
      %28 = sbr.rel (0) target = $region17
    $region16: #{tpu_custom_call.1} parent=1 // pred_region
      _
    $region17: #{tpu_custom_call.1} parent=1 // pred_fallthru
      _
    // Predicated region
    $region18: #{tpu_custom_call.1} parent=1 // pred_check
      _
    $region19: #{tpu_custom_call.1} parent=1 // pred_check_branch
      %30 = sbr.rel (0) target = $region21
    $region20: #{tpu_custom_call.1} parent=1 // pred_region
      _
    $region21: #{tpu_custom_call.1} parent=1 // pred_fallthru
      _
    // Predicated region
    $region22: #{tpu_custom_call.1} parent=1 // pred_check
      _
    $region23: #{tpu_custom_call.1} parent=1 // pred_check_branch
      %32 = sbr.rel (0) target = $region25
    $region24: #{tpu_custom_call.1} parent=1 // pred_region
      _
    $region25: #{tpu_custom_call.1} parent=1 // pred_fallthru
      _
    // Predicated region
    $region26: #{tpu_custom_call.1} parent=1 // pred_check
      _
    $region27: #{tpu_custom_call.1} parent=1 // pred_check_branch
      %34 = sbr.rel (0) target = $region29
    $region28: #{tpu_custom_call.1} parent=1 // pred_region
      %35 = dma.done [#allocation3], 32
    $region29: #{tpu_custom_call.1} parent=1 // pred_fallthru
      _
    %v36 = vld [vmem:[%s2] sm:$0x1]
    %v37 = vld [vmem:[%s3] sm:$0x1]
    %v38 = vsub.f32 %v36, %v37
    %v39 = vand.u32 2147483647, %v38
    %vm40 = vcmask 385024
    %v41 = vsel %vm40, %v39, 0.0
    %42 = vadd.xlane.f32.xlu0 %v41
    %v43 = vpop.xlane.xlu0 %42
    %v44 = vrot.slane %v43, 4
    %v45 = vadd.f32 %v43, %v44
    %v46 = vrot.slane %v45, 2
    %v47 = vadd.f32 %v45, %v46
    %v48 = vrot.slane %v47, 1
    %v49 = vadd.f32 %v47, %v48
    %s50 = vtos %v49
    %s51 = smul.f32 %s50, 0.020833334
    %v52 = vld [vmem:[%s4] sm:$0x1]
    %v53 = vld [vmem:[%s5] sm:$0x1]
    %v54 = vsub.f32 %v52, %v53
    %v55 = vand.u32 2147483647, %v54
    %vm56 = vcmask 516096
    %v57 = vsel %vm56, %v55, 0.0
    %58 = vadd.xlane.f32.xlu0 %v57
    %v59 = vpop.xlane.xlu0 %58
    %v60 = vrot.slane %v59, 4
    %v61 = vadd.f32 %v59, %v60
    %v62 = vrot.slane %v61, 2
    %v63 = vadd.f32 %v61, %v62
    %v64 = vrot.slane %v63, 1
    %v65 = vadd.f32 %v63, %v64
    %s66 = vtos %v65
    %s67 = smul.f32 %s66, 0.015625
    %v68 = vld [vmem:[#allocation2] sm:$0x3]
    %v69 = vsub.f32 0.0, %v68
    %v70 = vmul.f32 %v69, 1.442695
    %v71 = vpow.pop %v70
    %v72 = vld [vmem:[%s1] sm:$0x1]
    %v73 = vlaneseq
    %v74 = vand.u32 %v73, 127
    %vm75 = vcmp.eq.s32.totalorder %v74, 1
    %v76 = vstv %s51
    %v77 = vsel %vm75, %v76, 0.0
    %vm78 = vcmp.eq.s32.totalorder %v74, 3
    %v79 = vstv %s67
    %v80 = vsel %vm78, %v79, %v77
    %v81 = vmul.f32 %v71, %v80
    %v82 = vadd.f32 %v81, %v68
    %vm83 = vcmask 32768
    %v84 = vsel %vm83, %v82, 0.0
    %85 = vadd.xlane.f32.xlu0 %v84
    %v86 = vpop.xlane.xlu0 %85
    %v87 = vrot.slane %v86, 4
    %v88 = vadd.f32 %v86, %v87
    %v89 = vrot.slane %v88, 2
    %v90 = vadd.f32 %v88, %v89
    %v91 = vrot.slane %v90, 1
    %v92 = vadd.f32 %v90, %v91
    %s93 = vtos %v92
    %vm94 = vcmp.lt.s32.totalorder %v74, 3
    %vm95 = vcmp.ne.f32.partialorder %v72, 0.0
    %v96 = vsel %vm95, 1, 0
    %v97 = vcvt.s32.f32 %v96
    %v98 = vsel %vm94, 1.0, %v97
    %v100 = vlaneseq
    %v101 = vshrl.u32 %v100, 7
    %v102 = vsub.s32 0, %v101
    %v103 = vrot.slane %v72, %v102
    %v105 = vmul.f32 %v71, %v103
    %v106 = vadd.f32 %v105, %v68
    %v108 = vrot.slane %v106, 1
    %v110 = vmul.f32 %v98, %v108
    %v111 = vsel %vm83, %v110, 0.0
    %112 = vadd.xlane.f32.xlu0 %v111
    %v113 = vpop.xlane.xlu0 %112
    %v114 = vrot.slane %v113, 4
    %v115 = vadd.f32 %v113, %v114
    %v116 = vrot.slane %v115, 2
    %v117 = vadd.f32 %v115, %v116
    %v118 = vrot.slane %v117, 1
    %v119 = vadd.f32 %v117, %v118
    %s120 = vtos %v119
    %s121 = sadd.f32 %s93, %s120
    %vm122 = vcmp.eq.s32.totalorder %v74, 0
    %v123 = vstv %s121
    %v124 = vsel %vm122, %v123, 0.0
    %vm125 = vcmp.eq.s32.totalorder %v74, 2
    %v126 = vsel %vm125, %v79, %v124
    %v127 = vsel %vm78, %v76, %v126
    %128 = vst [vmem:[#allocation5] sm:$0x1] %v127
    // Predicated region
    $region30: #{tpu_custom_call.1} parent=1 // pred_check
      _
    $region31: #{tpu_custom_call.1} parent=1 // pred_check_branch
      %130 = sbr.rel (0) target = $region33
    $region32: #{tpu_custom_call.1} parent=1 // pred_region
      %s132 = ssub.s32 16, 16
      %133 = vsyncadd [#allocation4], %s132
      %s135 = sshll.u32 [#allocation5], 4
      %s136 = int_to_ptr.vmem [resolvable:$true] %s135
      %138 = dma.vmem_to_hbm [thread:$0]  %s136, 16, %s6, [#allocation4]
    $region33: #{tpu_custom_call.1} parent=1 // pred_fallthru
      _
    // Predicated region
    $region34: #{tpu_custom_call.1} parent=1 // pred_check
      _
    $region35: #{tpu_custom_call.1} parent=1 // pred_check_branch
      %140 = sbr.rel (0) target = $region37
    $region36: #{tpu_custom_call.1} parent=1 // pred_region
      %141 = dma.done [#allocation4], 16
    $region37: #{tpu_custom_call.1} parent=1 // pred_fallthru
      _
    %142 = vsyncpa [#allocation3], 1
    %143 = vsyncpa [#allocation4], 1

</llo_original>
